<compile_context>
chip_gen: v7x
topology: tpu7x:2x2x1
jax: 0.10.0
libtpu: 0.0.40
codegen_flags: <defaults>
</compile_context>

<pallas_src>
import functools

import numpy as np
import jax
import jax.numpy as jnp
from jax.experimental import pallas as pl
from jax.experimental.pallas import tpu as pltpu


def _round_up(n, m):
    return ((n + m - 1) // m) * m


_TILE_BUCKETS = (8, 16, 32, 64, 128, 256, 512, 1024, 2048)
_MAX_TILE_N = 2048


def _pick_tile_n(n):
    """Bucketed row-tile: one tile for small N, >= 2 parallel grid steps
    (v7x dual-TC) for large N, capped at 2048 rows per tile."""
    if n <= 1024:
        for t in _TILE_BUCKETS:
            if t >= n:
                return t
    target = -(-n // 2)  # cdiv(n, 2): keep at least two grid steps
    for t in _TILE_BUCKETS:
        if t >= target:
            return min(t, _MAX_TILE_N)
    return _MAX_TILE_N


def _fused_rbf_linear_kernel(x0_ref, x1_ref, cen_ref, ng_ref, sel_ref,
                             w_ref, b_ref, o_ref):
    """out = exp(neg_gamma * (x_sel - centers)^2) @ W + b, both conditions fused.

    Padded columns and absent-condition columns carry zero W rows, so no
    in-kernel mask is needed; their exp() values are annihilated by the matmul.
    """
    # One vselect picks pH vs temperature input per column (sel is 0/1).
    xe = jnp.where(sel_ref[...] != 0.0, x1_ref[...], x0_ref[...])   # (TN, C)
    diff = xe - cen_ref[...]                                        # (TN, C)
    rbf = jnp.exp(diff * diff * ng_ref[...])                        # -gamma folded in (VPU+EUP)
    o_ref[...] = jnp.dot(rbf, w_ref[...],
                         preferred_element_type=jnp.float32) + b_ref[...]   # MXU


@functools.partial(jax.jit, static_argnames=("tile_n",))
def fused_rbf_linear(x0, x1, centers, neg_gamma, sel, w, b, *, tile_n):
    """x0/x1: (N,1); centers/neg_gamma/sel: (1,C); w: (C,E); b: (1,E) -> (N,E)."""
    n = x0.shape[0]
    c = centers.shape[1]
    e = w.shape[1]
    assert n % tile_n == 0, "pad N to a multiple of tile_n in the caller"

    vec_spec = pl.BlockSpec((1, c), lambda i: (0, 0))
    return pl.pallas_call(
        _fused_rbf_linear_kernel,
        out_shape=jax.ShapeDtypeStruct((n, e), jnp.float32),
        grid_spec=pltpu.PrefetchScalarGridSpec(
            num_scalar_prefetch=0,
            grid=(n // tile_n,),
            in_specs=[
                pl.BlockSpec((tile_n, 1), lambda i: (i, 0)),   # x0 tile
                pl.BlockSpec((tile_n, 1), lambda i: (i, 0)),   # x1 tile
                vec_spec,                                      # centers (full)
                vec_spec,                                      # neg_gamma (full)
                vec_spec,                                      # selector (full)
                pl.BlockSpec((c, e), lambda i: (0, 0)),        # stacked weight (full)
                pl.BlockSpec((1, e), lambda i: (0, 0)),        # summed bias (full)
            ],
            out_specs=pl.BlockSpec((tile_n, e), lambda i: (i, 0)),
        ),
        compiler_params=pltpu.CompilerParams(
            dimension_semantics=("parallel",)),
    )(x0, x1, centers, neg_gamma, sel, w, b)


class ConditionFloatRBFPallas:
    """JAX/Pallas re-implementation of MTLKcatKM ConditionFloatRBF (fused)."""

    def __init__(self, embed_dim, key, small_n_fallback=64):
        self.embed_dim = int(embed_dim)
        self.small_n_fallback = int(small_n_fallback)
        self.condition_names = ["pH", "temperature"]
        self.rbf_params = {
            "pH": (np.arange(0, 14, 0.1), 10.0),          # 140 centers
            "temperature": (np.arange(0, 100, 1), 10.0),  # 100 centers
        }

        # Per-condition parameters (torch nn.Linear-like init).
        self.cond = {}
        off = 0
        for idx, name in enumerate(self.condition_names):
            centers_np, gamma = self.rbf_params[name]
            centers_np = np.asarray(centers_np, np.float32)
            c_i = centers_np.shape[0]
            key, kw, kb = jax.random.split(key, 3)
            bound = 1.0 / np.sqrt(c_i)
            w = jax.random.uniform(kw, (self.embed_dim, c_i), jnp.float32, -bound, bound)
            b = jax.random.uniform(kb, (self.embed_dim,), jnp.float32, -bound, bound)
            self.cond[name] = dict(
                centers=centers_np, gamma=float(gamma),
                w=np.asarray(w), b=np.asarray(b),
                start=off, size=c_i, index=idx,
            )
            off += c_i

        c_total = off                                   # 240
        self.c_pad = _round_up(c_total, 128)            # 256 (lane aligned)
        self.e_pad = _round_up(self.embed_dim, 128)     # 128 (lane-dense output)
        # TODO(synk): on v5e/v6e an unpadded E=32 out_spec (masked stores) may
        # reduce output HBM writeback 4x at large N; keep lane-dense for v7x.

        # Fused, padded static vectors (device-resident, shared by all combos).
        centers_pad = np.zeros((1, self.c_pad), np.float32)
        neg_gamma_pad = np.zeros((1, self.c_pad), np.float32)
        sel_pad = np.zeros((1, self.c_pad), np.float32)
        for name in self.condition_names:
            p = self.cond[name]
            s, ci = p["start"], p["size"]
            centers_pad[0, s:s + ci] = p["centers"]
            neg_gamma_pad[0, s:s + ci] = -p["gamma"]
            sel_pad[0, s:s + ci] = float(p["index"])     # 0 -> pH column, 1 -> temperature
        self._centers_pad = jnp.asarray(centers_pad)
        self._neg_gamma_pad = jnp.asarray(neg_gamma_pad)
        self._sel_pad = jnp.asarray(sel_pad)

        # Precompute the three presence combos: weight matrix with absent
        # conditions' rows zeroed (mask folded into W) + summed bias.
        self._combos = {}
        for combo in [(True, False), (False, True), (True, True)]:
            w_pad = np.zeros((self.c_pad, self.e_pad), np.float32)
            b_sum = np.zeros((1, self.e_pad), np.float32)
            for present, name in zip(combo, self.condition_names):
                if not present:
                    continue
                p = self.cond[name]
                s, ci = p["start"], p["size"]
                w_pad[s:s + ci, :self.embed_dim] = p["w"].T
                b_sum[0, :self.embed_dim] += p["b"]
            self._combos[combo] = (jnp.asarray(w_pad), jnp.asarray(b_sum))

        # Device-resident per-condition params for the small-N plain-XLA path.
        self._cond_dev = {}
        for name in self.condition_names:
            p = self.cond[name]
            self._cond_dev[name] = dict(
                centers=jnp.asarray(p["centers"]).reshape(1, -1),
                neg_gamma=jnp.float32(-p["gamma"]),
                wT=jnp.asarray(p["w"].T),
                b=jnp.asarray(p["b"]).reshape(1, -1),
            )

    def _xla_forward(self, xs):
        """Plain-XLA path for tiny batches (launch overhead > compute)."""
        out = None
        for name, xv in zip(self.condition_names, xs):
            if xv is None:
                continue
            p = self._cond_dev[name]
            rbf = jnp.exp(p["neg_gamma"] * jnp.square(xv - p["centers"]))
            y = rbf @ p["wT"] + p["b"]
            out = y if out is None else out + y
        return out

    def __call__(self, condition):
        present = tuple(
            (name in condition and condition[name] is not None)
            for name in self.condition_names)
        if not any(present):
            # Matches the PyTorch module's `out_embed = 0` base case (type
            # inconsistency inherited from the spec).
            return 0

        xs = []
        n = None
        for name, pres in zip(self.condition_names, present):
            if not pres:
                xs.append(None)
                continue
            xv = jnp.reshape(jnp.asarray(condition[name], jnp.float32), (-1, 1))
            if n is None:
                n = xv.shape[0]
            assert xv.shape[0] == n, "all present conditions must share batch size"
            xs.append(xv)

        if n <= self.small_n_fallback:
            return self._xla_forward(xs)

        tile_n = _pick_tile_n(n)
        n_pad = _round_up(n, tile_n)

        def padded(xv):
            if xv is None:
                xv = jnp.zeros((n, 1), jnp.float32)  # columns killed by zero W rows
            if n_pad != n:
                xv = jnp.pad(xv, ((0, n_pad - n), (0, 0)))
            return xv

        x0 = padded(xs[0])
        x1 = padded(xs[1])
        w, b = self._combos[present]

        y = fused_rbf_linear(
            x0, x1,
            self._centers_pad, self._neg_gamma_pad, self._sel_pad,
            w, b, tile_n=tile_n)
        return y[:n, :self.embed_dim]

    # pure-JAX reference (mirrors the PyTorch forward) for sanity checking
    def reference(self, condition):
        out_embed = 0
        for name in self.condition_names:
            if name in condition and condition[name] is not None:
                p = self.cond[name]
                x2d = jnp.reshape(jnp.asarray(condition[name], jnp.float32), (-1, 1))
                centers = jnp.asarray(p["centers"]).reshape(1, -1)
                rbf = jnp.exp(-p["gamma"] * jnp.square(x2d - centers))
                out_embed = out_embed + rbf @ jnp.asarray(p["w"]).T \
                    + jnp.asarray(p["b"]).reshape(1, -1)
        return out_embed


if __name__ == "__main__":
    key = jax.random.PRNGKey(0)
    key, k_model, k_ph, k_temp = jax.random.split(key, 4)

    embed_dim = 32
    model = ConditionFloatRBFPallas(embed_dim, k_model)

    # 1) Tiny batch: plain-XLA fallback path.
    batch_small = 8
    cond_small = {
        "pH": jax.random.uniform(k_ph, (batch_small,), jnp.float32, 0.0, 14.0),
        "temperature": jax.random.uniform(k_temp, (batch_small,), jnp.float32, 0.0, 100.0),
    }
    out_s = jax.block_until_ready(model(cond_small))
    assert out_s.shape == (batch_small, embed_dim)
    np.testing.assert_allclose(np.asarray(out_s), np.asarray(model.reference(cond_small)),
                               rtol=1e-5, atol=1e-5)

    # 2) Larger batch: fused Pallas kernel path (both conditions present).
    key, k_ph2, k_temp2 = jax.random.split(key, 3)
    batch = 200
    cond = {
        "pH": jax.random.uniform(k_ph2, (batch,), jnp.float32, 0.0, 14.0),
        "temperature": jax.random.uniform(k_temp2, (batch,), jnp.float32, 0.0, 100.0),
    }
    out = jax.block_until_ready(model(cond))
    assert out.shape == (batch, embed_dim)
    np.testing.assert_allclose(np.asarray(out), np.asarray(model.reference(cond)),
                               rtol=1e-5, atol=1e-5)

    # 3) Single condition present: exercises the precomputed combo selection.
    cond_ph_only = {"pH": cond["pH"]}
    out1 = jax.block_until_ready(model(cond_ph_only))
    np.testing.assert_allclose(np.asarray(out1), np.asarray(model.reference(cond_ph_only)),
                               rtol=1e-5, atol=1e-5)

    print("KERNEL_OK")
</pallas_src>

<mosaic_0001>
module attributes {stable_mosaic.version = 11 : i64} {
  func.func @_fused_rbf_linear_kernel(%arg0: i32, %arg1: memref<256x1xf32, #tpu.memory_space<vmem>>, %arg2: memref<256x1xf32, #tpu.memory_space<vmem>>, %arg3: memref<1x256xf32, #tpu.memory_space<vmem>>, %arg4: memref<1x256xf32, #tpu.memory_space<vmem>>, %arg5: memref<1x256xf32, #tpu.memory_space<vmem>>, %arg6: memref<256x128xf32, #tpu.memory_space<vmem>>, %arg7: memref<1x128xf32, #tpu.memory_space<vmem>>, %arg8: memref<256x128xf32, #tpu.memory_space<vmem>>) attributes {dimension_semantics = [#tpu.dimension_semantics<parallel>], iteration_bounds = array<i64: 1>, scalar_prefetch = 0 : i64, scratch_operands = 0 : i64, tpu.core_type = #tpu.core_type<tc>, window_params = [{transform_indices = @transform_0, window_bounds = array<i64: 256, 1>}, {transform_indices = @transform_1, window_bounds = array<i64: 256, 1>}, {pipeline_mode = #tpu.pipeline_mode<synchronous>, transform_indices = @transform_2, window_bounds = array<i64: 1, 256>}, {pipeline_mode = #tpu.pipeline_mode<synchronous>, transform_indices = @transform_3, window_bounds = array<i64: 1, 256>}, {pipeline_mode = #tpu.pipeline_mode<synchronous>, transform_indices = @transform_4, window_bounds = array<i64: 1, 256>}, {pipeline_mode = #tpu.pipeline_mode<synchronous>, transform_indices = @transform_5, window_bounds = array<i64: 256, 128>}, {pipeline_mode = #tpu.pipeline_mode<synchronous>, transform_indices = @transform_6, window_bounds = array<i64: 1, 128>}, {transform_indices = @transform_7, window_bounds = array<i64: 256, 128>}]} {
    %c0 = arith.constant 0 : index
    %c0_0 = arith.constant 0 : index
    %0 = vector.load %arg5[%c0, %c0_0] : memref<1x256xf32, #tpu.memory_space<vmem>>, vector<1x256xf32>
    %cst = arith.constant 0.000000e+00 : f32
    %1 = vector.broadcast %cst : f32 to vector<1x256xf32>
    %2 = arith.cmpf one, %0, %1 : vector<1x256xf32>
    %c0_1 = arith.constant 0 : index
    %c0_2 = arith.constant 0 : index
    %3 = vector.load %arg2[%c0_1, %c0_2] : memref<256x1xf32, #tpu.memory_space<vmem>>, vector<256x1xf32>
    %c0_3 = arith.constant 0 : index
    %c0_4 = arith.constant 0 : index
    %4 = vector.load %arg1[%c0_3, %c0_4] : memref<256x1xf32, #tpu.memory_space<vmem>>, vector<256x1xf32>
    %5 = vector.shape_cast %2 : vector<1x256xi1> to vector<1x256xi1>
    %6 = vector.broadcast %5 : vector<1x256xi1> to vector<256x256xi1>
    %7 = vector.shape_cast %3 : vector<256x1xf32> to vector<256x1xf32>
    %8 = vector.broadcast %7 : vector<256x1xf32> to vector<256x256xf32>
    %9 = vector.shape_cast %4 : vector<256x1xf32> to vector<256x1xf32>
    %10 = vector.broadcast %9 : vector<256x1xf32> to vector<256x256xf32>
    %11 = arith.select %6, %8, %10 : vector<256x256xi1>, vector<256x256xf32>
    %c0_5 = arith.constant 0 : index
    %c0_6 = arith.constant 0 : index
    %12 = vector.load %arg3[%c0_5, %c0_6] : memref<1x256xf32, #tpu.memory_space<vmem>>, vector<1x256xf32>
    %13 = vector.broadcast %12 : vector<1x256xf32> to vector<256x256xf32>
    %14 = arith.subf %11, %13 : vector<256x256xf32>
    %15 = arith.mulf %14, %14 : vector<256x256xf32>
    %c0_7 = arith.constant 0 : index
    %c0_8 = arith.constant 0 : index
    %16 = vector.load %arg4[%c0_7, %c0_8] : memref<1x256xf32, #tpu.memory_space<vmem>>, vector<1x256xf32>
    %17 = vector.broadcast %16 : vector<1x256xf32> to vector<256x256xf32>
    %18 = arith.mulf %15, %17 : vector<256x256xf32>
    %19 = math.exp %18 : vector<256x256xf32>
    %c0_9 = arith.constant 0 : index
    %c0_10 = arith.constant 0 : index
    %20 = vector.load %arg6[%c0_9, %c0_10] : memref<256x128xf32, #tpu.memory_space<vmem>>, vector<256x128xf32>
    %cst_11 = arith.constant dense<0.000000e+00> : vector<256x128xf32>
    %21 = tpu.matmul %19, %20, %cst_11 {dimension_numbers = #tpu.dot_dimension_numbers<[1], [0], [0], [1], [0, 0, 1, 1], [], []>} : vector<256x256xf32>, vector<256x128xf32>, vector<256x128xf32> -> vector<256x128xf32>
    %c0_12 = arith.constant 0 : index
    %c0_13 = arith.constant 0 : index
    %22 = vector.load %arg7[%c0_12, %c0_13] : memref<1x128xf32, #tpu.memory_space<vmem>>, vector<1x128xf32>
    %23 = vector.broadcast %22 : vector<1x128xf32> to vector<256x128xf32>
    %24 = arith.addf %21, %23 : vector<256x128xf32>
    %c0_14 = arith.constant 0 : index
    %c0_15 = arith.constant 0 : index
    %25 = vector.load %arg8[%c0_14, %c0_15] : memref<256x128xf32, #tpu.memory_space<vmem>>, vector<256x128xf32>
    tpu.vector_store %arg8[%c0_14, %c0_15], %24 {strides = array<i32>} : memref<256x128xf32, #tpu.memory_space<vmem>>, vector<256x128xf32>,
    return
  }
  func.func @transform_0(%arg0: i32) -> (i32, i32) {
    %c0_i32 = arith.constant 0 : i32
    %c0_i32_0 = arith.constant 0 : i32
    return %arg0, %c0_i32 : i32, i32
  }
  func.func @transform_1(%arg0: i32) -> (i32, i32) {
    %c0_i32 = arith.constant 0 : i32
    %c0_i32_0 = arith.constant 0 : i32
    return %arg0, %c0_i32 : i32, i32
  }
  func.func @transform_2(%arg0: i32) -> (i32, i32) {
    %c0_i32 = arith.constant 0 : i32
    %c0_i32_0 = arith.constant 0 : i32
    %c0_i32_1 = arith.constant 0 : i32
    return %c0_i32, %c0_i32_0 : i32, i32
  }
  func.func @transform_3(%arg0: i32) -> (i32, i32) {
    %c0_i32 = arith.constant 0 : i32
    %c0_i32_0 = arith.constant 0 : i32
    %c0_i32_1 = arith.constant 0 : i32
    return %c0_i32, %c0_i32_0 : i32, i32
  }
  func.func @transform_4(%arg0: i32) -> (i32, i32) {
    %c0_i32 = arith.constant 0 : i32
    %c0_i32_0 = arith.constant 0 : i32
    %c0_i32_1 = arith.constant 0 : i32
    return %c0_i32, %c0_i32_0 : i32, i32
  }
  func.func @transform_5(%arg0: i32) -> (i32, i32) {
    %c0_i32 = arith.constant 0 : i32
    %c0_i32_0 = arith.constant 0 : i32
    %c0_i32_1 = arith.constant 0 : i32
    return %c0_i32, %c0_i32_0 : i32, i32
  }
  func.func @transform_6(%arg0: i32) -> (i32, i32) {
    %c0_i32 = arith.constant 0 : i32
    %c0_i32_0 = arith.constant 0 : i32
    %c0_i32_1 = arith.constant 0 : i32
    return %c0_i32, %c0_i32_0 : i32, i32
  }
  func.func @transform_7(%arg0: i32) -> (i32, i32) {
    %c0_i32 = arith.constant 0 : i32
    %c0_i32_0 = arith.constant 0 : i32
    return %arg0, %c0_i32 : i32, i32
  }
}

</mosaic_0001>

<llo_original>
// kernel: fused_rbf_linear.1
$region0: #{fused_rbf_linear.1}
  #allocation0 [shape = 'u32[]', space=smem, size = 0x4, offset = 0x4, fixed_abs, tag = 'smem constant byte address 0x4 - core index']
  #allocation1 [shape = 'u32[144,128]{1,0:T(1,128)}', space=vmem, size = 0x12000, scoped, tag = 'internal scratch']
  %s0 = inlined_call_operand.vmem [shape: f32[256,1], index: 0, kind: input, shape index: {}]
  %s1 = inlined_call_operand.vmem [shape: f32[256,1], index: 1, kind: input, shape index: {}]
  %s2 = inlined_call_operand.vmem [shape: f32[1,256], index: 2, kind: input, shape index: {}]
  %s3 = inlined_call_operand.vmem [shape: f32[1,256], index: 3, kind: input, shape index: {}]
  %s4 = inlined_call_operand.vmem [shape: f32[1,256], index: 4, kind: input, shape index: {}]
  %s5 = inlined_call_operand.vmem [shape: f32[256,128], index: 5, kind: input, shape index: {}]
  %s6 = inlined_call_operand.vmem [shape: f32[1,128], index: 6, kind: input, shape index: {}]
  %s7 = inlined_call_operand.hbm [shape: f32[256,128], index: 7, kind: output, shape index: {}]
  %s8 = sld [smem:[#allocation0]]
  $region38: #{fused_rbf_linear.1} parent=0
    _
  %s10 = ssub.s32 1, %s8
  %s11 = scalar_select 0, %s10, %s8
  $region1: #{fused_rbf_linear.1} parent=0
    #allocation2 [shape = 'u8[131072]{0}', space=vmem, size = 0x20000, scoped, tag = 'output window, operand 0, single buffered']
    #allocation3 [shape = 's32[1]{0}', space=sflag, size = 0x4, scoped, tag = 'scoped memory for fused_rbf_linear.1']
    %12 = vsyncpa [#allocation3], 0
    // Predicated region
    $region2: #{fused_rbf_linear.1} parent=1 // pred_check
      _
    $region3: #{fused_rbf_linear.1} parent=1 // pred_check_branch
      %14 = sbr.rel (0) target = $region5
    $region4: #{fused_rbf_linear.1} parent=1 // pred_region
      _
    $region5: #{fused_rbf_linear.1} parent=1 // pred_fallthru
      _
    // Predicated region
    $region6: #{fused_rbf_linear.1} parent=1 // pred_check
      _
    $region7: #{fused_rbf_linear.1} parent=1 // pred_check_branch
      %16 = sbr.rel (0) target = $region9
    $region8: #{fused_rbf_linear.1} parent=1 // pred_region
      _
    $region9: #{fused_rbf_linear.1} parent=1 // pred_fallthru
      _
    // Predicated region
    $region10: #{fused_rbf_linear.1} parent=1 // pred_check
      _
    $region11: #{fused_rbf_linear.1} parent=1 // pred_check_branch
      %18 = sbr.rel (0) target = $region13
    $region12: #{fused_rbf_linear.1} parent=1 // pred_region
      _
    $region13: #{fused_rbf_linear.1} parent=1 // pred_fallthru
      _
    // Predicated region
    $region14: #{fused_rbf_linear.1} parent=1 // pred_check
      _
    $region15: #{fused_rbf_linear.1} parent=1 // pred_check_branch
      %20 = sbr.rel (0) target = $region17
    $region16: #{fused_rbf_linear.1} parent=1 // pred_region
      _
    $region17: #{fused_rbf_linear.1} parent=1 // pred_fallthru
      _
    // Predicated region
    $region18: #{fused_rbf_linear.1} parent=1 // pred_check
      _
    $region19: #{fused_rbf_linear.1} parent=1 // pred_check_branch
      %22 = sbr.rel (0) target = $region21
    $region20: #{fused_rbf_linear.1} parent=1 // pred_region
      _
    $region21: #{fused_rbf_linear.1} parent=1 // pred_fallthru
      _
    // Predicated region
    $region22: #{fused_rbf_linear.1} parent=1 // pred_check
      _
    $region23: #{fused_rbf_linear.1} parent=1 // pred_check_branch
      %24 = sbr.rel (0) target = $region25
    $region24: #{fused_rbf_linear.1} parent=1 // pred_region
      _
    $region25: #{fused_rbf_linear.1} parent=1 // pred_fallthru
      _
    // Predicated region
    $region26: #{fused_rbf_linear.1} parent=1 // pred_check
      _
    $region27: #{fused_rbf_linear.1} parent=1 // pred_check_branch
      %26 = sbr.rel (0) target = $region29
    $region28: #{fused_rbf_linear.1} parent=1 // pred_region
      _
    $region29: #{fused_rbf_linear.1} parent=1 // pred_fallthru
      _
    %v27 = vld [vmem:[%s4] sm:$0x3]
    %vm28 = vcmp.ne.f32.partialorder %v27, 0.0
    %v29 = vld [vmem:[%s1] sm:$0xff]
    %v30 = vld [vmem:[%s1 + $0x8] sm:$0xff]
    %v31 = vld [vmem:[%s1 + $0x10] sm:$0xff]
    %v32 = vld [vmem:[%s1 + $0x18] sm:$0xff]
    %v33 = vld [vmem:[%s1 + $0x20] sm:$0xff]
    %v34 = vld [vmem:[%s1 + $0x28] sm:$0xff]
    %v35 = vld [vmem:[%s1 + $0x30] sm:$0xff]
    %v36 = vld [vmem:[%s1 + $0x38] sm:$0xff]
    %v37 = vld [vmem:[%s1 + $0x40] sm:$0xff]
    %v38 = vld [vmem:[%s1 + $0x48] sm:$0xff]
    %v39 = vld [vmem:[%s1 + $0x50] sm:$0xff]
    %v40 = vld [vmem:[%s1 + $0x58] sm:$0xff]
    %v41 = vld [vmem:[%s1 + $0x60] sm:$0xff]
    %v42 = vld [vmem:[%s1 + $0x68] sm:$0xff]
    %v43 = vld [vmem:[%s1 + $0x70] sm:$0xff]
    %v44 = vld [vmem:[%s1 + $0x78] sm:$0xff]
    %v45 = vld [vmem:[%s1 + $0x80] sm:$0xff]
    %v46 = vld [vmem:[%s1 + $0x88] sm:$0xff]
    %v47 = vld [vmem:[%s1 + $0x90] sm:$0xff]
    %v48 = vld [vmem:[%s1 + $0x98] sm:$0xff]
    %v49 = vld [vmem:[%s1 + $0xa0] sm:$0xff]
    %v50 = vld [vmem:[%s1 + $0xa8] sm:$0xff]
    %v51 = vld [vmem:[%s1 + $0xb0] sm:$0xff]
    %v52 = vld [vmem:[%s1 + $0xb8] sm:$0xff]
    %v53 = vld [vmem:[%s1 + $0xc0] sm:$0xff]
    %v54 = vld [vmem:[%s1 + $0xc8] sm:$0xff]
    %v55 = vld [vmem:[%s1 + $0xd0] sm:$0xff]
    %v56 = vld [vmem:[%s1 + $0xd8] sm:$0xff]
    %v57 = vld [vmem:[%s1 + $0xe0] sm:$0xff]
    %v58 = vld [vmem:[%s1 + $0xe8] sm:$0xff]
    %v59 = vld [vmem:[%s1 + $0xf0] sm:$0xff]
    %v60 = vld [vmem:[%s1 + $0xf8] sm:$0xff]
    %v61 = vld [vmem:[%s0] sm:$0xff]
    %v62 = vld [vmem:[%s0 + $0x8] sm:$0xff]
    %v63 = vld [vmem:[%s0 + $0x10] sm:$0xff]
    %v64 = vld [vmem:[%s0 + $0x18] sm:$0xff]
    %v65 = vld [vmem:[%s0 + $0x20] sm:$0xff]
    %v66 = vld [vmem:[%s0 + $0x28] sm:$0xff]
    %v67 = vld [vmem:[%s0 + $0x30] sm:$0xff]
    %v68 = vld [vmem:[%s0 + $0x38] sm:$0xff]
    %v69 = vld [vmem:[%s0 + $0x40] sm:$0xff]
    %v70 = vld [vmem:[%s0 + $0x48] sm:$0xff]
    %v71 = vld [vmem:[%s0 + $0x50] sm:$0xff]
    %v72 = vld [vmem:[%s0 + $0x58] sm:$0xff]
    %v73 = vld [vmem:[%s0 + $0x60] sm:$0xff]
    %v74 = vld [vmem:[%s0 + $0x68] sm:$0xff]
    %v75 = vld [vmem:[%s0 + $0x70] sm:$0xff]
    %v76 = vld [vmem:[%s0 + $0x78] sm:$0xff]
    %v77 = vld [vmem:[%s0 + $0x80] sm:$0xff]
    %v78 = vld [vmem:[%s0 + $0x88] sm:$0xff]
    %v79 = vld [vmem:[%s0 + $0x90] sm:$0xff]
    %v80 = vld [vmem:[%s0 + $0x98] sm:$0xff]
    %v81 = vld [vmem:[%s0 + $0xa0] sm:$0xff]
    %v82 = vld [vmem:[%s0 + $0xa8] sm:$0xff]
    %v83 = vld [vmem:[%s0 + $0xb0] sm:$0xff]
    %v84 = vld [vmem:[%s0 + $0xb8] sm:$0xff]
    %v85 = vld [vmem:[%s0 + $0xc0] sm:$0xff]
    %v86 = vld [vmem:[%s0 + $0xc8] sm:$0xff]
    %v87 = vld [vmem:[%s0 + $0xd0] sm:$0xff]
    %v88 = vld [vmem:[%s0 + $0xd8] sm:$0xff]
    %v89 = vld [vmem:[%s0 + $0xe0] sm:$0xff]
    %v90 = vld [vmem:[%s0 + $0xe8] sm:$0xff]
    %v91 = vld [vmem:[%s0 + $0xf0] sm:$0xff]
    %v92 = vld [vmem:[%s0 + $0xf8] sm:$0xff]
    %v93 = vsel %vm28, 1, 0
    %v94 = vlaneseq
    %v95 = vshrl.u32 %v94, 7
    %v96 = vsub.s32 0, %v95
    %v97 = vrot.slane %v93, %v96
    %v98 = vlaneseq
    %v99 = vshrl.u32 %v98, 7
    %v100 = vsub.s32 1, %v99
    %v101 = vrot.slane %v93, %v100
    %vm102 = vcmp.eq.s32.totalorder %v97, 1
    %vm103 = vcmp.eq.s32.totalorder %v101, 1
    %105 = vset.pattern.permute.xlu0 0
    %106 = vperm.xlu0 %105, %v29
    %v107 = vpop.permute.xlu0 %106
    %110 = vset.pattern.permute.xlu0 0
    %111 = vperm.xlu0 %110, %v30
    %v112 = vpop.permute.xlu0 %111
    %115 = vset.pattern.permute.xlu0 0
    %116 = vperm.xlu0 %115, %v31
    %v117 = vpop.permute.xlu0 %116
    %120 = vset.pattern.permute.xlu0 0
    %121 = vperm.xlu0 %120, %v32
    %v122 = vpop.permute.xlu0 %121
    %125 = vset.pattern.permute.xlu0 0
    %126 = vperm.xlu0 %125, %v33
    %v127 = vpop.permute.xlu0 %126
    %130 = vset.pattern.permute.xlu0 0
    %131 = vperm.xlu0 %130, %v34
    %v132 = vpop.permute.xlu0 %131
    %135 = vset.pattern.permute.xlu0 0
    %136 = vperm.xlu0 %135, %v35
    %v137 = vpop.permute.xlu0 %136
    %140 = vset.pattern.permute.xlu0 0
    %141 = vperm.xlu0 %140, %v36
    %v142 = vpop.permute.xlu0 %141
    %145 = vset.pattern.permute.xlu0 0
    %146 = vperm.xlu0 %145, %v37
    %v147 = vpop.permute.xlu0 %146
    %150 = vset.pattern.permute.xlu0 0
    %151 = vperm.xlu0 %150, %v38
    %v152 = vpop.permute.xlu0 %151
    %155 = vset.pattern.permute.xlu0 0
    %156 = vperm.xlu0 %155, %v39
    %v157 = vpop.permute.xlu0 %156
    %160 = vset.pattern.permute.xlu0 0
    %161 = vperm.xlu0 %160, %v40
    %v162 = vpop.permute.xlu0 %161
    %165 = vset.pattern.permute.xlu0 0
    %166 = vperm.xlu0 %165, %v41
    %v167 = vpop.permute.xlu0 %166
    %170 = vset.pattern.permute.xlu0 0
    %171 = vperm.xlu0 %170, %v42
    %v172 = vpop.permute.xlu0 %171
    %175 = vset.pattern.permute.xlu0 0
    %176 = vperm.xlu0 %175, %v43
    %v177 = vpop.permute.xlu0 %176
    %180 = vset.pattern.permute.xlu0 0
    %181 = vperm.xlu0 %180, %v44
    %v182 = vpop.permute.xlu0 %181
    %185 = vset.pattern.permute.xlu0 0
    %186 = vperm.xlu0 %185, %v45
    %v187 = vpop.permute.xlu0 %186
    %190 = vset.pattern.permute.xlu0 0
    %191 = vperm.xlu0 %190, %v46
    %v192 = vpop.permute.xlu0 %191
    %195 = vset.pattern.permute.xlu0 0
    %196 = vperm.xlu0 %195, %v47
    %v197 = vpop.permute.xlu0 %196
    %200 = vset.pattern.permute.xlu0 0
    %201 = vperm.xlu0 %200, %v48
    %v202 = vpop.permute.xlu0 %201
    %205 = vset.pattern.permute.xlu0 0
    %206 = vperm.xlu0 %205, %v49
    %v207 = vpop.permute.xlu0 %206
    %210 = vset.pattern.permute.xlu0 0
    %211 = vperm.xlu0 %210, %v50
    %v212 = vpop.permute.xlu0 %211
    %215 = vset.pattern.permute.xlu0 0
    %216 = vperm.xlu0 %215, %v51
    %v217 = vpop.permute.xlu0 %216
    %220 = vset.pattern.permute.xlu0 0
    %221 = vperm.xlu0 %220, %v52
    %v222 = vpop.permute.xlu0 %221
    %225 = vset.pattern.permute.xlu0 0
    %226 = vperm.xlu0 %225, %v53
    %v227 = vpop.permute.xlu0 %226
    %230 = vset.pattern.permute.xlu0 0
    %231 = vperm.xlu0 %230, %v54
    %v232 = vpop.permute.xlu0 %231
    %235 = vset.pattern.permute.xlu0 0
    %236 = vperm.xlu0 %235, %v55
    %v237 = vpop.permute.xlu0 %236
    %240 = vset.pattern.permute.xlu0 0
    %241 = vperm.xlu0 %240, %v56
    %v242 = vpop.permute.xlu0 %241
    %245 = vset.pattern.permute.xlu0 0
    %246 = vperm.xlu0 %245, %v57
    %v247 = vpop.permute.xlu0 %246
    %250 = vset.pattern.permute.xlu0 0
    %251 = vperm.xlu0 %250, %v58
    %v252 = vpop.permute.xlu0 %251
    %255 = vset.pattern.permute.xlu0 0
    %256 = vperm.xlu0 %255, %v59
    %v257 = vpop.permute.xlu0 %256
    %260 = vset.pattern.permute.xlu0 0
    %261 = vperm.xlu0 %260, %v60
    %v262 = vpop.permute.xlu0 %261
    %265 = vset.pattern.permute.xlu0 0
    %266 = vperm.xlu0 %265, %v61
    %v267 = vpop.permute.xlu0 %266
    %270 = vset.pattern.permute.xlu0 0
    %271 = vperm.xlu0 %270, %v62
    %v272 = vpop.permute.xlu0 %271
    %275 = vset.pattern.permute.xlu0 0
    %276 = vperm.xlu0 %275, %v63
    %v277 = vpop.permute.xlu0 %276
    %280 = vset.pattern.permute.xlu0 0
    %281 = vperm.xlu0 %280, %v64
    %v282 = vpop.permute.xlu0 %281
    %285 = vset.pattern.permute.xlu0 0
    %286 = vperm.xlu0 %285, %v65
    %v287 = vpop.permute.xlu0 %286
    %290 = vset.pattern.permute.xlu0 0
    %291 = vperm.xlu0 %290, %v66
    %v292 = vpop.permute.xlu0 %291
    %295 = vset.pattern.permute.xlu0 0
    %296 = vperm.xlu0 %295, %v67
    %v297 = vpop.permute.xlu0 %296
    %300 = vset.pattern.permute.xlu0 0
    %301 = vperm.xlu0 %300, %v68
    %v302 = vpop.permute.xlu0 %301
    %305 = vset.pattern.permute.xlu0 0
    %306 = vperm.xlu0 %305, %v69
    %v307 = vpop.permute.xlu0 %306
    %310 = vset.pattern.permute.xlu0 0
    %311 = vperm.xlu0 %310, %v70
    %v312 = vpop.permute.xlu0 %311
    %315 = vset.pattern.permute.xlu0 0
    %316 = vperm.xlu0 %315, %v71
    %v317 = vpop.permute.xlu0 %316
    %320 = vset.pattern.permute.xlu0 0
    %321 = vperm.xlu0 %320, %v72
    %v322 = vpop.permute.xlu0 %321
    %325 = vset.pattern.permute.xlu0 0
    %326 = vperm.xlu0 %325, %v73
    %v327 = vpop.permute.xlu0 %326
    %330 = vset.pattern.permute.xlu0 0
    %331 = vperm.xlu0 %330, %v74
    %v332 = vpop.permute.xlu0 %331
    %335 = vset.pattern.permute.xlu0 0
    %336 = vperm.xlu0 %335, %v75
    %v337 = vpop.permute.xlu0 %336
    %340 = vset.pattern.permute.xlu0 0
    %341 = vperm.xlu0 %340, %v76
    %v342 = vpop.permute.xlu0 %341
    %345 = vset.pattern.permute.xlu0 0
    %346 = vperm.xlu0 %345, %v77
    %v347 = vpop.permute.xlu0 %346
    %350 = vset.pattern.permute.xlu0 0
    %351 = vperm.xlu0 %350, %v78
    %v352 = vpop.permute.xlu0 %351
    %355 = vset.pattern.permute.xlu0 0
    %356 = vperm.xlu0 %355, %v79
    %v357 = vpop.permute.xlu0 %356
    %360 = vset.pattern.permute.xlu0 0
    %361 = vperm.xlu0 %360, %v80
    %v362 = vpop.permute.xlu0 %361
    %365 = vset.pattern.permute.xlu0 0
    %366 = vperm.xlu0 %365, %v81
    %v367 = vpop.permute.xlu0 %366
    %370 = vset.pattern.permute.xlu0 0
    %371 = vperm.xlu0 %370, %v82
    %v372 = vpop.permute.xlu0 %371
    %375 = vset.pattern.permute.xlu0 0
    %376 = vperm.xlu0 %375, %v83
    %v377 = vpop.permute.xlu0 %376
    %380 = vset.pattern.permute.xlu0 0
    %381 = vperm.xlu0 %380, %v84
    %v382 = vpop.permute.xlu0 %381
    %385 = vset.pattern.permute.xlu0 0
    %386 = vperm.xlu0 %385, %v85
    %v387 = vpop.permute.xlu0 %386
    %390 = vset.pattern.permute.xlu0 0
    %391 = vperm.xlu0 %390, %v86
    %v392 = vpop.permute.xlu0 %391
    %395 = vset.pattern.permute.xlu0 0
    %396 = vperm.xlu0 %395, %v87
    %v397 = vpop.permute.xlu0 %396
    %400 = vset.pattern.permute.xlu0 0
    %401 = vperm.xlu0 %400, %v88
    %v402 = vpop.permute.xlu0 %401
    %405 = vset.pattern.permute.xlu0 0
    %406 = vperm.xlu0 %405, %v89
    %v407 = vpop.permute.xlu0 %406
    %410 = vset.pattern.permute.xlu0 0
    %411 = vperm.xlu0 %410, %v90
    %v412 = vpop.permute.xlu0 %411
    %415 = vset.pattern.permute.xlu0 0
    %416 = vperm.xlu0 %415, %v91
    %v417 = vpop.permute.xlu0 %416
    %420 = vset.pattern.permute.xlu0 0
    %421 = vperm.xlu0 %420, %v92
    %v422 = vpop.permute.xlu0 %421
    %v424 = vsel %vm102, %v107, %v267
    %v425 = vsel %vm103, %v107, %v267
    %v426 = vsel %vm102, %v112, %v272
    %v427 = vsel %vm103, %v112, %v272
    %v428 = vsel %vm102, %v117, %v277
    %v429 = vsel %vm103, %v117, %v277
    %v430 = vsel %vm102, %v122, %v282
    %v431 = vsel %vm103, %v122, %v282
    %v432 = vsel %vm102, %v127, %v287
    %v433 = vsel %vm103, %v127, %v287
    %v434 = vsel %vm102, %v132, %v292
    %v435 = vsel %vm103, %v132, %v292
    %v436 = vsel %vm102, %v137, %v297
    %v437 = vsel %vm103, %v137, %v297
    %v438 = vsel %vm102, %v142, %v302
    %v439 = vsel %vm103, %v142, %v302
    %v440 = vsel %vm102, %v147, %v307
    %v441 = vsel %vm103, %v147, %v307
    %v442 = vsel %vm102, %v152, %v312
    %v443 = vsel %vm103, %v152, %v312
    %v444 = vsel %vm102, %v157, %v317
    %v445 = vsel %vm103, %v157, %v317
    %v446 = vsel %vm102, %v162, %v322
    %v447 = vsel %vm103, %v162, %v322
    %v448 = vsel %vm102, %v167, %v327
    %v449 = vsel %vm103, %v167, %v327
    %v450 = vsel %vm102, %v172, %v332
    %v451 = vsel %vm103, %v172, %v332
    %v452 = vsel %vm102, %v177, %v337
    %v453 = vsel %vm103, %v177, %v337
    %v454 = vsel %vm102, %v182, %v342
    %v455 = vsel %vm103, %v182, %v342
    %v456 = vsel %vm102, %v187, %v347
    %v457 = vsel %vm103, %v187, %v347
    %v458 = vsel %vm102, %v192, %v352
    %v459 = vsel %vm103, %v192, %v352
    %v460 = vsel %vm102, %v197, %v357
    %v461 = vsel %vm103, %v197, %v357
    %v462 = vsel %vm102, %v202, %v362
    %v463 = vsel %vm103, %v202, %v362
    %v464 = vsel %vm102, %v207, %v367
    %v465 = vsel %vm103, %v207, %v367
    %v466 = vsel %vm102, %v212, %v372
    %v467 = vsel %vm103, %v212, %v372
    %v468 = vsel %vm102, %v217, %v377
    %v469 = vsel %vm103, %v217, %v377
    %v470 = vsel %vm102, %v222, %v382
    %v471 = vsel %vm103, %v222, %v382
    %v472 = vsel %vm102, %v227, %v387
    %v473 = vsel %vm103, %v227, %v387
    %v474 = vsel %vm102, %v232, %v392
    %v475 = vsel %vm103, %v232, %v392
    %v476 = vsel %vm102, %v237, %v397
    %v477 = vsel %vm103, %v237, %v397
    %v478 = vsel %vm102, %v242, %v402
    %v479 = vsel %vm103, %v242, %v402
    %v480 = vsel %vm102, %v247, %v407
    %v481 = vsel %vm103, %v247, %v407
    %v482 = vsel %vm102, %v252, %v412
    %v483 = vsel %vm103, %v252, %v412
    %v484 = vsel %vm102, %v257, %v417
    %v485 = vsel %vm103, %v257, %v417
    %v486 = vsel %vm102, %v262, %v422
    %v487 = vsel %vm103, %v262, %v422
    %v488 = vld [vmem:[%s2] sm:$0x3]
    %v490 = vlaneseq
    %v491 = vshrl.u32 %v490, 7
    %v492 = vsub.s32 0, %v491
    %v493 = vrot.slane %v488, %v492
    %v494 = vlaneseq
    %v495 = vshrl.u32 %v494, 7
    %v496 = vsub.s32 1, %v495
    %v497 = vrot.slane %v488, %v496
    %v500 = vsub.f32 %v424, %v493
    %v501 = vsub.f32 %v425, %v497
    %v502 = vsub.f32 %v426, %v493
    %v503 = vsub.f32 %v427, %v497
    %v504 = vsub.f32 %v428, %v493
    %v505 = vsub.f32 %v429, %v497
    %v506 = vsub.f32 %v430, %v493
    %v507 = vsub.f32 %v431, %v497
    %v508 = vsub.f32 %v432, %v493
    %v509 = vsub.f32 %v433, %v497
    %v510 = vsub.f32 %v434, %v493
    %v511 = vsub.f32 %v435, %v497
    %v512 = vsub.f32 %v436, %v493
    %v513 = vsub.f32 %v437, %v497
    %v514 = vsub.f32 %v438, %v493
    %v515 = vsub.f32 %v439, %v497
    %v516 = vsub.f32 %v440, %v493
    %v517 = vsub.f32 %v441, %v497
    %v518 = vsub.f32 %v442, %v493
    %v519 = vsub.f32 %v443, %v497
    %v520 = vsub.f32 %v444, %v493
    %v521 = vsub.f32 %v445, %v497
    %v522 = vsub.f32 %v446, %v493
    %v523 = vsub.f32 %v447, %v497
    %v524 = vsub.f32 %v448, %v493
    %v525 = vsub.f32 %v449, %v497
    %v526 = vsub.f32 %v450, %v493
    %v527 = vsub.f32 %v451, %v497
    %v528 = vsub.f32 %v452, %v493
    %v529 = vsub.f32 %v453, %v497
    %v530 = vsub.f32 %v454, %v493
    %v531 = vsub.f32 %v455, %v497
    %v532 = vsub.f32 %v456, %v493
    %v533 = vsub.f32 %v457, %v497
    %v534 = vsub.f32 %v458, %v493
    %v535 = vsub.f32 %v459, %v497
    %v536 = vsub.f32 %v460, %v493
    %v537 = vsub.f32 %v461, %v497
    %v538 = vsub.f32 %v462, %v493
    %v539 = vsub.f32 %v463, %v497
    %v540 = vsub.f32 %v464, %v493
    %v541 = vsub.f32 %v465, %v497
    %v542 = vsub.f32 %v466, %v493
    %v543 = vsub.f32 %v467, %v497
    %v544 = vsub.f32 %v468, %v493
    %v545 = vsub.f32 %v469, %v497
    %v546 = vsub.f32 %v470, %v493
    %v547 = vsub.f32 %v471, %v497
    %v548 = vsub.f32 %v472, %v493
    %v549 = vsub.f32 %v473, %v497
    %v550 = vsub.f32 %v474, %v493
    %v551 = vsub.f32 %v475, %v497
    %v552 = vsub.f32 %v476, %v493
    %v553 = vsub.f32 %v477, %v497
    %v554 = vsub.f32 %v478, %v493
    %v555 = vsub.f32 %v479, %v497
    %v556 = vsub.f32 %v480, %v493
    %v557 = vsub.f32 %v481, %v497
    %v558 = vsub.f32 %v482, %v493
    %v559 = vsub.f32 %v483, %v497
    %v560 = vsub.f32 %v484, %v493
    %v561 = vsub.f32 %v485, %v497
    %v562 = vsub.f32 %v486, %v493
    %v563 = vsub.f32 %v487, %v497
    %v564 = vmul.f32 %v500, %v500
    %v565 = vmul.f32 %v501, %v501
    %v566 = vmul.f32 %v502, %v502
    %v567 = vmul.f32 %v503, %v503
    %v568 = vmul.f32 %v504, %v504
    %v569 = vmul.f32 %v505, %v505
    %v570 = vmul.f32 %v506, %v506
    %v571 = vmul.f32 %v507, %v507
    %v572 = vmul.f32 %v508, %v508
    %v573 = vmul.f32 %v509, %v509
    %v574 = vmul.f32 %v510, %v510
    %v575 = vmul.f32 %v511, %v511
    %v576 = vmul.f32 %v512, %v512
    %v577 = vmul.f32 %v513, %v513
    %v578 = vmul.f32 %v514, %v514
    %v579 = vmul.f32 %v515, %v515
    %v580 = vmul.f32 %v516, %v516
    %v581 = vmul.f32 %v517, %v517
    %v582 = vmul.f32 %v518, %v518
    %v583 = vmul.f32 %v519, %v519
    %v584 = vmul.f32 %v520, %v520
    %v585 = vmul.f32 %v521, %v521
    %v586 = vmul.f32 %v522, %v522
    %v587 = vmul.f32 %v523, %v523
    %v588 = vmul.f32 %v524, %v524
    %v589 = vmul.f32 %v525, %v525
    %v590 = vmul.f32 %v526, %v526
    %v591 = vmul.f32 %v527, %v527
    %v592 = vmul.f32 %v528, %v528
    %v593 = vmul.f32 %v529, %v529
    %v594 = vmul.f32 %v530, %v530
    %v595 = vmul.f32 %v531, %v531
    %v596 = vmul.f32 %v532, %v532
    %v597 = vmul.f32 %v533, %v533
    %v598 = vmul.f32 %v534, %v534
    %v599 = vmul.f32 %v535, %v535
    %v600 = vmul.f32 %v536, %v536
    %v601 = vmul.f32 %v537, %v537
    %v602 = vmul.f32 %v538, %v538
    %v603 = vmul.f32 %v539, %v539
    %v604 = vmul.f32 %v540, %v540
    %v605 = vmul.f32 %v541, %v541
    %v606 = vmul.f32 %v542, %v542
    %v607 = vmul.f32 %v543, %v543
    %v608 = vmul.f32 %v544, %v544
    %v609 = vmul.f32 %v545, %v545
    %v610 = vmul.f32 %v546, %v546
    %v611 = vmul.f32 %v547, %v547
    %v612 = vmul.f32 %v548, %v548
    %v613 = vmul.f32 %v549, %v549
    %v614 = vmul.f32 %v550, %v550
    %v615 = vmul.f32 %v551, %v551
    %v616 = vmul.f32 %v552, %v552
    %v617 = vmul.f32 %v553, %v553
    %v618 = vmul.f32 %v554, %v554
    %v619 = vmul.f32 %v555, %v555
    %v620 = vmul.f32 %v556, %v556
    %v621 = vmul.f32 %v557, %v557
    %v622 = vmul.f32 %v558, %v558
    %v623 = vmul.f32 %v559, %v559
    %v624 = vmul.f32 %v560, %v560
    %v625 = vmul.f32 %v561, %v561
    %v626 = vmul.f32 %v562, %v562
    %v627 = vmul.f32 %v563, %v563
    %v628 = vld [vmem:[%s3] sm:$0x3]
    %v630 = vlaneseq
    %v631 = vshrl.u32 %v630, 7
    %v632 = vsub.s32 0, %v631
    %v633 = vrot.slane %v628, %v632
    %v634 = vlaneseq
    %v635 = vshrl.u32 %v634, 7
    %v636 = vsub.s32 1, %v635
    %v637 = vrot.slane %v628, %v636
    %v640 = vmul.f32 %v564, %v633
    %v641 = vmul.f32 %v565, %v637
    %v642 = vmul.f32 %v566, %v633
    %v643 = vmul.f32 %v567, %v637
    %v644 = vmul.f32 %v568, %v633
    %v645 = vmul.f32 %v569, %v637
    %v646 = vmul.f32 %v570, %v633
    %v647 = vmul.f32 %v571, %v637
    %v648 = vmul.f32 %v572, %v633
    %v649 = vmul.f32 %v573, %v637
    %v650 = vmul.f32 %v574, %v633
    %v651 = vmul.f32 %v575, %v637
    %v652 = vmul.f32 %v576, %v633
    %v653 = vmul.f32 %v577, %v637
    %v654 = vmul.f32 %v578, %v633
    %v655 = vmul.f32 %v579, %v637
    %v656 = vmul.f32 %v580, %v633
    %v657 = vmul.f32 %v581, %v637
    %v658 = vmul.f32 %v582, %v633
    %v659 = vmul.f32 %v583, %v637
    %v660 = vmul.f32 %v584, %v633
    %v661 = vmul.f32 %v585, %v637
    %v662 = vmul.f32 %v586, %v633
    %v663 = vmul.f32 %v587, %v637
    %v664 = vmul.f32 %v588, %v633
    %v665 = vmul.f32 %v589, %v637
    %v666 = vmul.f32 %v590, %v633
    %v667 = vmul.f32 %v591, %v637
    %v668 = vmul.f32 %v592, %v633
    %v669 = vmul.f32 %v593, %v637
    %v670 = vmul.f32 %v594, %v633
    %v671 = vmul.f32 %v595, %v637
    %v672 = vmul.f32 %v596, %v633
    %v673 = vmul.f32 %v597, %v637
    %v674 = vmul.f32 %v598, %v633
    %v675 = vmul.f32 %v599, %v637
    %v676 = vmul.f32 %v600, %v633
    %v677 = vmul.f32 %v601, %v637
    %v678 = vmul.f32 %v602, %v633
    %v679 = vmul.f32 %v603, %v637
    %v680 = vmul.f32 %v604, %v633
    %v681 = vmul.f32 %v605, %v637
    %v682 = vmul.f32 %v606, %v633
    %v683 = vmul.f32 %v607, %v637
    %v684 = vmul.f32 %v608, %v633
    %v685 = vmul.f32 %v609, %v637
    %v686 = vmul.f32 %v610, %v633
    %v687 = vmul.f32 %v611, %v637
    %v688 = vmul.f32 %v612, %v633
    %v689 = vmul.f32 %v613, %v637
    %v690 = vmul.f32 %v614, %v633
    %v691 = vmul.f32 %v615, %v637
    %v692 = vmul.f32 %v616, %v633
    %v693 = vmul.f32 %v617, %v637
    %v694 = vmul.f32 %v618, %v633
    %v695 = vmul.f32 %v619, %v637
    %v696 = vmul.f32 %v620, %v633
    %v697 = vmul.f32 %v621, %v637
    %v698 = vmul.f32 %v622, %v633
    %v699 = vmul.f32 %v623, %v637
    %v700 = vmul.f32 %v624, %v633
    %v701 = vmul.f32 %v625, %v637
    %v702 = vmul.f32 %v626, %v633
    %v703 = vmul.f32 %v627, %v637
    %v704 = vmul.f32 %v640, 1.442695
    %v705 = vpow.pop %v704
    %v706 = vmul.f32 %v641, 1.442695
    %v707 = vpow.pop %v706
    %v708 = vmul.f32 %v642, 1.442695
    %v709 = vpow.pop %v708
    %v710 = vmul.f32 %v643, 1.442695
    %v711 = vpow.pop %v710
    %v712 = vmul.f32 %v644, 1.442695
    %v713 = vpow.pop %v712
    %v714 = vmul.f32 %v645, 1.442695
    %v715 = vpow.pop %v714
    %v716 = vmul.f32 %v646, 1.442695
    %v717 = vpow.pop %v716
    %v718 = vmul.f32 %v647, 1.442695
    %v719 = vpow.pop %v718
    %v720 = vmul.f32 %v648, 1.442695
    %v721 = vpow.pop %v720
    %v722 = vmul.f32 %v649, 1.442695
    %v723 = vpow.pop %v722
    %v724 = vmul.f32 %v650, 1.442695
    %v725 = vpow.pop %v724
    %v726 = vmul.f32 %v651, 1.442695
    %v727 = vpow.pop %v726
    %v728 = vmul.f32 %v652, 1.442695
    %v729 = vpow.pop %v728
    %v730 = vmul.f32 %v653, 1.442695
    %v731 = vpow.pop %v730
    %v732 = vmul.f32 %v654, 1.442695
    %v733 = vpow.pop %v732
    %v734 = vmul.f32 %v655, 1.442695
    %v735 = vpow.pop %v734
    %v736 = vmul.f32 %v656, 1.442695
    %v737 = vpow.pop %v736
    %v738 = vmul.f32 %v657, 1.442695
    %v739 = vpow.pop %v738
    %v740 = vmul.f32 %v658, 1.442695
    %v741 = vpow.pop %v740
    %v742 = vmul.f32 %v659, 1.442695
    %v743 = vpow.pop %v742
    %v744 = vmul.f32 %v660, 1.442695
    %v745 = vpow.pop %v744
    %v746 = vmul.f32 %v661, 1.442695
    %v747 = vpow.pop %v746
    %v748 = vmul.f32 %v662, 1.442695
    %v749 = vpow.pop %v748
    %v750 = vmul.f32 %v663, 1.442695
    %v751 = vpow.pop %v750
    %v752 = vmul.f32 %v664, 1.442695
    %v753 = vpow.pop %v752
    %v754 = vmul.f32 %v665, 1.442695
    %v755 = vpow.pop %v754
    %v756 = vmul.f32 %v666, 1.442695
    %v757 = vpow.pop %v756
    %v758 = vmul.f32 %v667, 1.442695
    %v759 = vpow.pop %v758
    %v760 = vmul.f32 %v668, 1.442695
    %v761 = vpow.pop %v760
    %v762 = vmul.f32 %v669, 1.442695
    %v763 = vpow.pop %v762
    %v764 = vmul.f32 %v670, 1.442695
    %v765 = vpow.pop %v764
    %v766 = vmul.f32 %v671, 1.442695
    %v767 = vpow.pop %v766
    %v768 = vmul.f32 %v672, 1.442695
    %v769 = vpow.pop %v768
    %v770 = vmul.f32 %v673, 1.442695
    %v771 = vpow.pop %v770
    %v772 = vmul.f32 %v674, 1.442695
    %v773 = vpow.pop %v772
    %v774 = vmul.f32 %v675, 1.442695
    %v775 = vpow.pop %v774
    %v776 = vmul.f32 %v676, 1.442695
    %v777 = vpow.pop %v776
    %v778 = vmul.f32 %v677, 1.442695
    %v779 = vpow.pop %v778
    %v780 = vmul.f32 %v678, 1.442695
    %v781 = vpow.pop %v780
    %v782 = vmul.f32 %v679, 1.442695
    %v783 = vpow.pop %v782
    %v784 = vmul.f32 %v680, 1.442695
    %v785 = vpow.pop %v784
    %v786 = vmul.f32 %v681, 1.442695
    %v787 = vpow.pop %v786
    %v788 = vmul.f32 %v682, 1.442695
    %v789 = vpow.pop %v788
    %v790 = vmul.f32 %v683, 1.442695
    %v791 = vpow.pop %v790
    %v792 = vmul.f32 %v684, 1.442695
    %v793 = vpow.pop %v792
    %v794 = vmul.f32 %v685, 1.442695
    %v795 = vpow.pop %v794
    %v796 = vmul.f32 %v686, 1.442695
    %v797 = vpow.pop %v796
    %v798 = vmul.f32 %v687, 1.442695
    %v799 = vpow.pop %v798
    %v800 = vmul.f32 %v688, 1.442695
    %v801 = vpow.pop %v800
    %v802 = vmul.f32 %v689, 1.442695
    %v803 = vpow.pop %v802
    %v804 = vmul.f32 %v690, 1.442695
    %v805 = vpow.pop %v804
    %v806 = vmul.f32 %v691, 1.442695
    %v807 = vpow.pop %v806
    %v808 = vmul.f32 %v692, 1.442695
    %v809 = vpow.pop %v808
    %v810 = vmul.f32 %v693, 1.442695
    %v811 = vpow.pop %v810
    %v812 = vmul.f32 %v694, 1.442695
    %v813 = vpow.pop %v812
    %v814 = vmul.f32 %v695, 1.442695
    %v815 = vpow.pop %v814
    %v816 = vmul.f32 %v696, 1.442695
    %v817 = vpow.pop %v816
    %v818 = vmul.f32 %v697, 1.442695
    %v819 = vpow.pop %v818
    %v820 = vmul.f32 %v698, 1.442695
    %v821 = vpow.pop %v820
    %v822 = vmul.f32 %v699, 1.442695
    %v823 = vpow.pop %v822
    %v824 = vmul.f32 %v700, 1.442695
    %v825 = vpow.pop %v824
    %v826 = vmul.f32 %v701, 1.442695
    %v827 = vpow.pop %v826
    %v828 = vmul.f32 %v702, 1.442695
    %v829 = vpow.pop %v828
    %v830 = vmul.f32 %v703, 1.442695
    %v831 = vpow.pop %v830
    %v832 = vld [vmem:[%s5] sm:$0xff]
    %v833 = vld [vmem:[%s5 + $0x8] sm:$0xff]
    %v834 = vld [vmem:[%s5 + $0x10] sm:$0xff]
    %v835 = vld [vmem:[%s5 + $0x18] sm:$0xff]
    %v836 = vld [vmem:[%s5 + $0x20] sm:$0xff]
    %v837 = vld [vmem:[%s5 + $0x28] sm:$0xff]
    %v838 = vld [vmem:[%s5 + $0x30] sm:$0xff]
    %v839 = vld [vmem:[%s5 + $0x38] sm:$0xff]
    %v840 = vld [vmem:[%s5 + $0x40] sm:$0xff]
    %v841 = vld [vmem:[%s5 + $0x48] sm:$0xff]
    %v842 = vld [vmem:[%s5 + $0x50] sm:$0xff]
    %v843 = vld [vmem:[%s5 + $0x58] sm:$0xff]
    %v844 = vld [vmem:[%s5 + $0x60] sm:$0xff]
    %v845 = vld [vmem:[%s5 + $0x68] sm:$0xff]
    %v846 = vld [vmem:[%s5 + $0x70] sm:$0xff]
    %v847 = vld [vmem:[%s5 + $0x78] sm:$0xff]
    %v848 = vld [vmem:[%s5 + $0x80] sm:$0xff]
    %v849 = vld [vmem:[%s5 + $0x88] sm:$0xff]
    %v850 = vld [vmem:[%s5 + $0x90] sm:$0xff]
    %v851 = vld [vmem:[%s5 + $0x98] sm:$0xff]
    %v852 = vld [vmem:[%s5 + $0xa0] sm:$0xff]
    %v853 = vld [vmem:[%s5 + $0xa8] sm:$0xff]
    %v854 = vld [vmem:[%s5 + $0xb0] sm:$0xff]
    %v855 = vld [vmem:[%s5 + $0xb8] sm:$0xff]
    %v856 = vld [vmem:[%s5 + $0xc0] sm:$0xff]
    %v857 = vld [vmem:[%s5 + $0xc8] sm:$0xff]
    %v858 = vld [vmem:[%s5 + $0xd0] sm:$0xff]
    %v859 = vld [vmem:[%s5 + $0xd8] sm:$0xff]
    %v860 = vld [vmem:[%s5 + $0xe0] sm:$0xff]
    %v861 = vld [vmem:[%s5 + $0xe8] sm:$0xff]
    %v862 = vld [vmem:[%s5 + $0xf0] sm:$0xff]
    %v863 = vld [vmem:[%s5 + $0xf8] sm:$0xff]
    %v864 = vld [vmem:[%s6] sm:$0x1]
    %v866 = vlaneseq
    %v867 = vshrl.u32 %v866, 7
    %v868 = vsub.s32 0, %v867
    %v869 = vrot.slane %v864, %v868
    %871 = vmatprep.subr.mxu0 0.0
    %872 = vmatpush1.msra.mxu0 %v832
    %873 = vmatprep.subr.mxu0 0.0
    %874 = vmatpush1.msra.mxu0 %v833
    %875 = vmatprep.subr.mxu0 0.0
    %876 = vmatpush1.msra.mxu0 %v834
    %877 = vmatprep.subr.mxu0 0.0
    %878 = vmatpush1.msra.mxu0 %v835
    %879 = vmatprep.subr.mxu0 0.0
    %880 = vmatpush1.msra.mxu0 %v836
    %881 = vmatprep.subr.mxu0 0.0
    %882 = vmatpush1.msra.mxu0 %v837
    %883 = vmatprep.subr.mxu0 0.0
    %884 = vmatpush1.msra.mxu0 %v838
    %885 = vmatprep.subr.mxu0 0.0
    %886 = vmatpush1.msra.mxu0 %v839
    %887 = vmatprep.subr.mxu0 0.0
    %888 = vmatpush1.msra.mxu0 %v840
    %889 = vmatprep.subr.mxu0 0.0
    %890 = vmatpush1.msra.mxu0 %v841
    %891 = vmatprep.subr.mxu0 0.0
    %892 = vmatpush1.msra.mxu0 %v842
    %893 = vmatprep.subr.mxu0 0.0
    %894 = vmatpush1.msra.mxu0 %v843
    %895 = vmatprep.subr.mxu0 0.0
    %896 = vmatpush1.msra.mxu0 %v844
    %897 = vmatprep.subr.mxu0 0.0
    %898 = vmatpush1.msra.mxu0 %v845
    %899 = vmatprep.subr.mxu0 0.0
    %900 = vmatpush1.msra.mxu0 %v846
    %901 = vmatprep.subr.mxu0 0.0
    %902 = vmatpush1.msra.mxu0 %v847
    %903 = vmatprep.subr.mxu0 0.0
    %904 = vmatpush1.msra.mxu0 %v848
    %905 = vmatprep.subr.mxu0 0.0
    %906 = vmatpush1.msra.mxu0 %v849
    %907 = vmatprep.subr.mxu0 0.0
    %908 = vmatpush1.msra.mxu0 %v850
    %909 = vmatprep.subr.mxu0 0.0
    %910 = vmatpush1.msra.mxu0 %v851
    %911 = vmatprep.subr.mxu0 0.0
    %912 = vmatpush1.msra.mxu0 %v852
    %913 = vmatprep.subr.mxu0 0.0
    %914 = vmatpush1.msra.mxu0 %v853
    %915 = vmatprep.subr.mxu0 0.0
    %916 = vmatpush1.msra.mxu0 %v854
    %917 = vmatprep.subr.mxu0 0.0
    %918 = vmatpush1.msra.mxu0 %v855
    %919 = vmatprep.subr.mxu0 0.0
    %920 = vmatpush1.msra.mxu0 %v856
    %921 = vmatprep.subr.mxu0 0.0
    %922 = vmatpush1.msra.mxu0 %v857
    %923 = vmatprep.subr.mxu0 0.0
    %924 = vmatpush1.msra.mxu0 %v858
    %925 = vmatprep.subr.mxu0 0.0
    %926 = vmatpush1.msra.mxu0 %v859
    %927 = vmatprep.subr.mxu0 0.0
    %928 = vmatpush1.msra.mxu0 %v860
    %929 = vmatprep.subr.mxu0 0.0
    %930 = vmatpush1.msra.mxu0 %v861
    %931 = vmatprep.subr.mxu0 0.0
    %932 = vmatpush1.msra.mxu0 %v862
    %933 = vmatprep.subr.mxu0 0.0
    %934 = vmatpush1.msra.mxu0 %v863
    %935 = vmatprep.mubr.f32.mxu0 %v707
    %936 = vmatmul.mubr.f32.gmra.mrb[0].mxu0 %v705
    %v937 = vpop.f32.mrb[0].mxu0
    %v938 = vadd.f32 %v869, %v937
    %v939 = vpop.f32.mrb[0].mxu0
    %940 = vmatprep.mubr.f32.mxu0 %v711
    %941 = vmatmul.mubr.f32.gmra.mrb[0].mxu0 %v709
    %v942 = vpop.f32.mrb[0].mxu0
    %v943 = vadd.f32 %v869, %v942
    %v944 = vpop.f32.mrb[0].mxu0
    %945 = vmatprep.mubr.f32.mxu0 %v715
    %946 = vmatmul.mubr.f32.gmra.mrb[0].mxu0 %v713
    %v947 = vpop.f32.mrb[0].mxu0
    %v948 = vadd.f32 %v869, %v947
    %v949 = vpop.f32.mrb[0].mxu0
    %950 = vmatprep.mubr.f32.mxu0 %v719
    %951 = vmatmul.mubr.f32.gmra.mrb[0].mxu0 %v717
    %v952 = vpop.f32.mrb[0].mxu0
    %v953 = vadd.f32 %v869, %v952
    %v954 = vpop.f32.mrb[0].mxu0
    %955 = vmatprep.mubr.f32.mxu0 %v723
    %956 = vmatmul.mubr.f32.gmra.mrb[0].mxu0 %v721
    %v957 = vpop.f32.mrb[0].mxu0
    %v958 = vadd.f32 %v869, %v957
    %v959 = vpop.f32.mrb[0].mxu0
    %960 = vmatprep.mubr.f32.mxu0 %v727
    %961 = vmatmul.mubr.f32.gmra.mrb[0].mxu0 %v725
    %v962 = vpop.f32.mrb[0].mxu0
    %v963 = vadd.f32 %v869, %v962
    %v964 = vpop.f32.mrb[0].mxu0
    %965 = vmatprep.mubr.f32.mxu0 %v731
    %966 = vmatmul.mubr.f32.gmra.mrb[0].mxu0 %v729
    %v967 = vpop.f32.mrb[0].mxu0
    %v968 = vadd.f32 %v869, %v967
    %v969 = vpop.f32.mrb[0].mxu0
    %970 = vmatprep.mubr.f32.mxu0 %v735
    %971 = vmatmul.mubr.f32.gmra.mrb[0].mxu0 %v733
    %v972 = vpop.f32.mrb[0].mxu0
    %v973 = vadd.f32 %v869, %v972
    %v974 = vpop.f32.mrb[0].mxu0
    %975 = vmatprep.mubr.f32.mxu0 %v739
    %976 = vmatmul.mubr.f32.gmra.mrb[0].mxu0 %v737
    %v977 = vpop.f32.mrb[0].mxu0
    %v978 = vadd.f32 %v869, %v977
    %v979 = vpop.f32.mrb[0].mxu0
    %980 = vmatprep.mubr.f32.mxu0 %v743
    %981 = vmatmul.mubr.f32.gmra.mrb[0].mxu0 %v741
    %v982 = vpop.f32.mrb[0].mxu0
    %v983 = vadd.f32 %v869, %v982
    %v984 = vpop.f32.mrb[0].mxu0
    %985 = vmatprep.mubr.f32.mxu0 %v747
    %986 = vmatmul.mubr.f32.gmra.mrb[0].mxu0 %v745
    %v987 = vpop.f32.mrb[0].mxu0
    %v988 = vadd.f32 %v869, %v987
    %v989 = vpop.f32.mrb[0].mxu0
    %990 = vmatprep.mubr.f32.mxu0 %v751
    %991 = vmatmul.mubr.f32.gmra.mrb[0].mxu0 %v749
    %v992 = vpop.f32.mrb[0].mxu0
    %v993 = vadd.f32 %v869, %v992
    %v994 = vpop.f32.mrb[0].mxu0
    %995 = vmatprep.mubr.f32.mxu0 %v755
    %996 = vmatmul.mubr.f32.gmra.mrb[0].mxu0 %v753
    %v997 = vpop.f32.mrb[0].mxu0
    %v998 = vadd.f32 %v869, %v997
    %v999 = vpop.f32.mrb[0].mxu0
    %1000 = vmatprep.mubr.f32.mxu0 %v759
    %1001 = vmatmul.mubr.f32.gmra.mrb[0].mxu0 %v757
    %v1002 = vpop.f32.mrb[0].mxu0
    %v1003 = vadd.f32 %v869, %v1002
    %v1004 = vpop.f32.mrb[0].mxu0
    %1005 = vmatprep.mubr.f32.mxu0 %v763
    %1006 = vmatmul.mubr.f32.gmra.mrb[0].mxu0 %v761
    %v1007 = vpop.f32.mrb[0].mxu0
    %v1008 = vadd.f32 %v869, %v1007
    %v1009 = vpop.f32.mrb[0].mxu0
    %1010 = vmatprep.mubr.f32.mxu0 %v767
    %1011 = vmatmul.mubr.f32.gmra.mrb[0].mxu0 %v765
    %v1012 = vpop.f32.mrb[0].mxu0
    %v1013 = vadd.f32 %v869, %v1012
    %v1014 = vpop.f32.mrb[0].mxu0
    %1015 = vmatprep.mubr.f32.mxu0 %v771
    %1016 = vmatmul.mubr.f32.gmra.mrb[0].mxu0 %v769
    %v1017 = vpop.f32.mrb[0].mxu0
    %v1018 = vadd.f32 %v869, %v1017
    %v1019 = vpop.f32.mrb[0].mxu0
    %1020 = vmatprep.mubr.f32.mxu0 %v775
    %1021 = vmatmul.mubr.f32.gmra.mrb[0].mxu0 %v773
    %v1022 = vpop.f32.mrb[0].mxu0
    %v1023 = vadd.f32 %v869, %v1022
    %v1024 = vpop.f32.mrb[0].mxu0
    %1025 = vmatprep.mubr.f32.mxu0 %v779
    %1026 = vmatmul.mubr.f32.gmra.mrb[0].mxu0 %v777
    %v1027 = vpop.f32.mrb[0].mxu0
    %v1028 = vadd.f32 %v869, %v1027
    %v1029 = vpop.f32.mrb[0].mxu0
    %1030 = vmatprep.mubr.f32.mxu0 %v783
    %1031 = vmatmul.mubr.f32.gmra.mrb[0].mxu0 %v781
    %v1032 = vpop.f32.mrb[0].mxu0
    %v1033 = vadd.f32 %v869, %v1032
    %v1034 = vpop.f32.mrb[0].mxu0
    %1035 = vmatprep.mubr.f32.mxu0 %v787
    %1036 = vmatmul.mubr.f32.gmra.mrb[0].mxu0 %v785
    %v1037 = vpop.f32.mrb[0].mxu0
    %v1038 = vadd.f32 %v869, %v1037
    %v1039 = vpop.f32.mrb[0].mxu0
    %1040 = vmatprep.mubr.f32.mxu0 %v791
    %1041 = vmatmul.mubr.f32.gmra.mrb[0].mxu0 %v789
    %v1042 = vpop.f32.mrb[0].mxu0
    %v1043 = vadd.f32 %v869, %v1042
    %v1044 = vpop.f32.mrb[0].mxu0
    %1045 = vmatprep.mubr.f32.mxu0 %v795
    %1046 = vmatmul.mubr.f32.gmra.mrb[0].mxu0 %v793
    %v1047 = vpop.f32.mrb[0].mxu0
    %v1048 = vadd.f32 %v869, %v1047
    %v1049 = vpop.f32.mrb[0].mxu0
    %1050 = vmatprep.mubr.f32.mxu0 %v799
    %1051 = vmatmul.mubr.f32.gmra.mrb[0].mxu0 %v797
    %v1052 = vpop.f32.mrb[0].mxu0
    %v1053 = vadd.f32 %v869, %v1052
    %v1054 = vpop.f32.mrb[0].mxu0
    %1055 = vmatprep.mubr.f32.mxu0 %v803
    %1056 = vmatmul.mubr.f32.gmra.mrb[0].mxu0 %v801
    %v1057 = vpop.f32.mrb[0].mxu0
    %v1058 = vadd.f32 %v869, %v1057
    %v1059 = vpop.f32.mrb[0].mxu0
    %1060 = vmatprep.mubr.f32.mxu0 %v807
    %1061 = vmatmul.mubr.f32.gmra.mrb[0].mxu0 %v805
    %v1062 = vpop.f32.mrb[0].mxu0
    %v1063 = vadd.f32 %v869, %v1062
    %v1064 = vpop.f32.mrb[0].mxu0
    %1065 = vmatprep.mubr.f32.mxu0 %v811
    %1066 = vmatmul.mubr.f32.gmra.mrb[0].mxu0 %v809
    %v1067 = vpop.f32.mrb[0].mxu0
    %v1068 = vadd.f32 %v869, %v1067
    %v1069 = vpop.f32.mrb[0].mxu0
    %1070 = vmatprep.mubr.f32.mxu0 %v815
    %1071 = vmatmul.mubr.f32.gmra.mrb[0].mxu0 %v813
    %v1072 = vpop.f32.mrb[0].mxu0
    %v1073 = vadd.f32 %v869, %v1072
    %v1074 = vpop.f32.mrb[0].mxu0
    %1075 = vmatprep.mubr.f32.mxu0 %v819
    %1076 = vmatmul.mubr.f32.gmra.mrb[0].mxu0 %v817
    %v1077 = vpop.f32.mrb[0].mxu0
    %v1078 = vadd.f32 %v869, %v1077
    %v1079 = vpop.f32.mrb[0].mxu0
    %1080 = vmatprep.mubr.f32.mxu0 %v823
    %1081 = vmatmul.mubr.f32.gmra.mrb[0].mxu0 %v821
    %v1082 = vpop.f32.mrb[0].mxu0
    %v1083 = vadd.f32 %v869, %v1082
    %v1084 = vpop.f32.mrb[0].mxu0
    %1085 = vmatprep.mubr.f32.mxu0 %v827
    %1086 = vmatmul.mubr.f32.gmra.mrb[0].mxu0 %v825
    %v1087 = vpop.f32.mrb[0].mxu0
    %v1088 = vadd.f32 %v869, %v1087
    %v1089 = vpop.f32.mrb[0].mxu0
    %1090 = vmatprep.mubr.f32.mxu0 %v831
    %1091 = vmatmul.mubr.f32.gmra.mrb[0].mxu0 %v829
    %v1092 = vpop.f32.mrb[0].mxu0
    %v1093 = vadd.f32 %v869, %v1092
    %v1094 = vpop.f32.mrb[0].mxu0
    %1095 = vdwg.mxu0
    %1096 = vst [vmem:[#allocation2] sm:$0xff] %v938
    %1097 = vst [vmem:[#allocation2 + $0x8] sm:$0xff] %v943
    %1098 = vst [vmem:[#allocation2 + $0x10] sm:$0xff] %v948
    %1099 = vst [vmem:[#allocation2 + $0x18] sm:$0xff] %v953
    %1100 = vst [vmem:[#allocation2 + $0x20] sm:$0xff] %v958
    %1101 = vst [vmem:[#allocation2 + $0x28] sm:$0xff] %v963
    %1102 = vst [vmem:[#allocation2 + $0x30] sm:$0xff] %v968
    %1103 = vst [vmem:[#allocation2 + $0x38] sm:$0xff] %v973
    %1104 = vst [vmem:[#allocation2 + $0x40] sm:$0xff] %v978
    %1105 = vst [vmem:[#allocation2 + $0x48] sm:$0xff] %v983
    %1106 = vst [vmem:[#allocation2 + $0x50] sm:$0xff] %v988
    %1107 = vst [vmem:[#allocation2 + $0x58] sm:$0xff] %v993
    %1108 = vst [vmem:[#allocation2 + $0x60] sm:$0xff] %v998
    %1109 = vst [vmem:[#allocation2 + $0x68] sm:$0xff] %v1003
    %1110 = vst [vmem:[#allocation2 + $0x70] sm:$0xff] %v1008
    %1111 = vst [vmem:[#allocation2 + $0x78] sm:$0xff] %v1013
    %1112 = vst [vmem:[#allocation2 + $0x80] sm:$0xff] %v1018
    %1113 = vst [vmem:[#allocation2 + $0x88] sm:$0xff] %v1023
    %1114 = vst [vmem:[#allocation2 + $0x90] sm:$0xff] %v1028
    %1115 = vst [vmem:[#allocation2 + $0x98] sm:$0xff] %v1033
    %1116 = vst [vmem:[#allocation2 + $0xa0] sm:$0xff] %v1038
    %1117 = vst [vmem:[#allocation2 + $0xa8] sm:$0xff] %v1043
    %1118 = vst [vmem:[#allocation2 + $0xb0] sm:$0xff] %v1048
    %1119 = vst [vmem:[#allocation2 + $0xb8] sm:$0xff] %v1053
    %1120 = vst [vmem:[#allocation2 + $0xc0] sm:$0xff] %v1058
    %1121 = vst [vmem:[#allocation2 + $0xc8] sm:$0xff] %v1063
    %1122 = vst [vmem:[#allocation2 + $0xd0] sm:$0xff] %v1068
    %1123 = vst [vmem:[#allocation2 + $0xd8] sm:$0xff] %v1073
    %1124 = vst [vmem:[#allocation2 + $0xe0] sm:$0xff] %v1078
    %1125 = vst [vmem:[#allocation2 + $0xe8] sm:$0xff] %v1083
    %1126 = vst [vmem:[#allocation2 + $0xf0] sm:$0xff] %v1088
    %1127 = vst [vmem:[#allocation2 + $0xf8] sm:$0xff] %v1093
    // Predicated region
    $region30: #{fused_rbf_linear.1} parent=1 // pred_check
      _
    $region31: #{fused_rbf_linear.1} parent=1 // pred_check_branch
      %1129 = sbr.rel (0) target = $region33
    $region32: #{fused_rbf_linear.1} parent=1 // pred_region
      %s1131 = ssub.s32 4096, 4096
      %1132 = vsyncadd [#allocation3], %s1131
      %s1133 = sshll.u32 [#allocation2], 4
      %s1134 = int_to_ptr.vmem [resolvable:$true] %s1133
      %1139 = dma.vmem_to_hbm [thread:$0]  %s1134, 4096, %s7, [#allocation3], 128, 128, 8
    $region33: #{fused_rbf_linear.1} parent=1 // pred_fallthru
      _
    // Predicated region
    $region34: #{fused_rbf_linear.1} parent=1 // pred_check
      _
    $region35: #{fused_rbf_linear.1} parent=1 // pred_check_branch
      %1141 = sbr.rel (0) target = $region37
    $region36: #{fused_rbf_linear.1} parent=1 // pred_region
      %1142 = dma.done [#allocation3], 4096
    $region37: #{fused_rbf_linear.1} parent=1 // pred_fallthru
      _
    %1143 = vsyncpa [#allocation3], 1

</llo_original>
